<compile_context>
chip_gen: v7x
topology: tpu7x:2x2x1
jax: 0.10.0
libtpu: 0.0.40
codegen_flags: <defaults>
</compile_context>

<pallas_src>
import jax
import jax.numpy as jnp
from jax.experimental import pallas as pl
from jax.experimental.pallas import tpu as pltpu


def _round_up(x, m):
    return ((x + m - 1) // m) * m


def _cdiv(a, b):
    return (a + b - 1) // b


def _vmem_capacity_bytes():
    """Physical VMEM per TensorCore; conservative 64 MiB (v7x) fallback."""
    try:
        cap = int(pltpu.get_tpu_info().vmem_capacity_bytes)
    except Exception:
        cap = 64 * 1024 * 1024
    return min(max(cap, 32 * 1024 * 1024), 128 * 1024 * 1024)


def _tile_bytes(rows, cols, itemsize):
    # Approximate VMEM footprint of a 2-D tile after (8, 128) layout padding.
    return _round_up(rows, 8) * _round_up(cols, 128) * itemsize


def _make_kernel(hw_total, block_hw, mask_tail):
    def kernel(x_ref, w_ref, b_ref, o_ref, acc_ref):
        # x_ref:   (block_b, C, block_hw) native dtype (one HW tile)
        # w_ref:   (C, n_pad) f32   weight.T pre-scaled by 1/(H*W)
        # b_ref:   (1, n_pad) f32   zero-padded bias
        # o_ref:   (block_b, n_pad) f32
        # acc_ref: (block_b, C) f32 pooled-sum accumulator (VMEM)
        k = pl.program_id(1)

        @pl.when(k == 0)
        def _():
            acc_ref[...] = jnp.zeros_like(acc_ref)

        xv = x_ref[...].astype(jnp.float32)
        if mask_tail:
            # Zero out the out-of-range lanes of the last HW tile before summing;
            # the 1/HW scale folded into w_ref always uses the true HW.
            hw_idx = jax.lax.broadcasted_iota(jnp.int32, xv.shape, 2)
            xv = jnp.where(hw_idx + k * block_hw < hw_total, xv, 0.0)

        # Partial global-average-pool: accumulate the sum over this HW tile.
        # TODO(synk): if per-step compute ever stops hiding behind DMA, switch to
        # a lane-wide (block_b, C, 128) VPU accumulator and collapse lanes once at
        # k == last (removes the per-step XLU cross-lane reduce + relayout).
        acc_ref[...] += jnp.sum(xv, axis=-1)

        @pl.when(k == pl.num_programs(1) - 1)
        def _():
            o_ref[...] = (
                jnp.dot(acc_ref[...], w_ref[...], preferred_element_type=jnp.float32)
                + b_ref[...]
            )

    return kernel


def prepare_head_params(weight, bias, hw):
    """Fold 1/(H*W) into weight.T and pad the class dim to 128 lanes.

    Depends only on the parameters -> call once at init time and reuse.
    """
    num_classes = weight.shape[0]
    n_pad = _round_up(num_classes, 128)
    w_t = jnp.pad(
        weight.T.astype(jnp.float32) * (1.0 / hw),
        ((0, 0), (0, n_pad - num_classes)),
    )
    b2d = jnp.pad(bias.astype(jnp.float32), (0, n_pad - num_classes)).reshape(1, n_pad)
    return w_t, b2d


def _choose_tiles(batch, channels, hw, itemsize, x_buf_budget):
    # Batch tile: multiple of 8 rows (clean lane-dense output stores), no batch
    # padding needed, and >= 2 tiles when B permits so the "parallel" axis can
    # shard across v7x's two TensorCores.
    if batch <= 8:
        block_b = batch  # single full-dim batch tile
        # TODO(synk): for tiny B on v7x, split the HW reduction across the two
        # TensorCores (per-core partial accumulators + final combine).
    else:
        block_b = min(256, _round_up(_cdiv(batch, 2), 8))

    def x_bytes(bb, bhw):
        return bb * _tile_bytes(channels, bhw, itemsize)

    # If even one 128-lane HW slab blows the budget (huge C * block_b), shrink
    # the batch tile first instead of silently exceeding VMEM.
    while block_b > 8 and x_bytes(block_b, 128) > x_buf_budget:
        block_b = max(8, _round_up(block_b // 2, 8))

    # HW tile: biggest 128-multiple within the per-buffer budget.
    lane_tiles = max(x_buf_budget // max(x_bytes(block_b, 128), 1), 1)
    block_hw = min(_round_up(hw, 128), lane_tiles * 128)
    if block_hw >= hw:
        block_hw = hw  # single full-dim HW tile (no tail, no masking)
    return block_b, block_hw


def simple_classification_head(x, weight, bias):
    """x: (B, C, H, W); weight: (num_classes, C); bias: (num_classes,)."""
    B, C, H, W = x.shape
    HW = H * W
    num_classes = weight.shape[0]
    n_pad = _round_up(num_classes, 128)

    # Parameter prep (hoistable to init time).
    w_t, b2d = prepare_head_params(weight, bias, HW)

    # Stream x in its native dtype; (B,C,H,W)->(B,C,HW) is a no-copy reshape.
    x_flat = x.reshape(B, C, HW)
    itemsize = x_flat.dtype.itemsize

    vmem_cap = _vmem_capacity_bytes()
    x_buf_budget = vmem_cap // 8  # per x buffer; x2 for double-buffering
    block_b, block_hw = _choose_tiles(B, C, HW, itemsize, x_buf_budget)
    grid = (_cdiv(B, block_b), _cdiv(HW, block_hw))
    mask_tail = (block_hw != HW) and (HW % block_hw != 0)

    # VMEM limit from the actual buffer footprint + headroom, capped below
    # physical VMEM so the compiler keeps room for internal scratch.
    needed = (
        2 * block_b * _tile_bytes(C, block_hw, itemsize)  # x (double-buffered)
        + 2 * _tile_bytes(C, n_pad, 4)                    # weight
        + 2 * _tile_bytes(1, n_pad, 4)                    # bias
        + 2 * _tile_bytes(block_b, n_pad, 4)              # output
        + _tile_bytes(block_b, C, 4)                      # accumulator
    )
    vmem_limit = int(
        max(32 * 1024 * 1024,
            min(needed + 8 * 1024 * 1024, vmem_cap - 16 * 1024 * 1024))
    )

    cost = pl.CostEstimate(
        flops=B * C * HW + 2 * B * C * n_pad,
        transcendentals=0,
        bytes_accessed=itemsize * B * C * HW + 4 * (C * n_pad + n_pad + B * n_pad),
    )

    kernel = _make_kernel(HW, block_hw, mask_tail)

    out_padded = pl.pallas_call(
        kernel,
        out_shape=jax.ShapeDtypeStruct((B, n_pad), jnp.float32),
        grid=grid,
        in_specs=[
            pl.BlockSpec((block_b, C, block_hw), lambda i, k: (i, 0, k)),
            pl.BlockSpec((C, n_pad), lambda i, k: (0, 0)),
            pl.BlockSpec((1, n_pad), lambda i, k: (0, 0)),
        ],
        out_specs=pl.BlockSpec((block_b, n_pad), lambda i, k: (i, 0)),
        scratch_shapes=[pltpu.VMEM((block_b, C), jnp.float32)],
        compiler_params=pltpu.CompilerParams(
            dimension_semantics=("parallel", "arbitrary"),
            vmem_limit_bytes=vmem_limit,
        ),
        cost_estimate=cost,
    )(x_flat, w_t, b2d)

    return out_padded[:, :num_classes]


def reference(x, weight, bias):
    pooled = jnp.mean(x.astype(jnp.float32), axis=(2, 3))  # (B, C)
    return pooled @ weight.T.astype(jnp.float32) + bias.astype(jnp.float32)


if __name__ == "__main__":
    B, C, H, W = 2, 64, 16, 16       # in_channels=64 (module default)
    num_classes = 37                 # module default

    key = jax.random.PRNGKey(0)
    kx, kw, kb = jax.random.split(key, 3)
    x = jax.random.normal(kx, (B, C, H, W), dtype=jnp.float32)
    # Deterministic synthetic parameters (shapes match nn.Linear(64, 37)).
    weight = jax.random.normal(kw, (num_classes, C), dtype=jnp.float32) * 0.05
    bias = jax.random.normal(kb, (num_classes,), dtype=jnp.float32) * 0.05

    out = jax.block_until_ready(simple_classification_head(x, weight, bias))
    ref = jax.block_until_ready(reference(x, weight, bias))

    assert out.shape == (B, num_classes)
    assert jnp.allclose(out, ref, atol=1e-4, rtol=1e-4), "mismatch vs reference"
    print("KERNEL_OK")
</pallas_src>

<mosaic_0001>
module attributes {stable_mosaic.version = 11 : i64} {
  func.func @kernel(%arg0: i32, %arg1: i32, %arg2: memref<2x64x256xf32, #tpu.memory_space<vmem>>, %arg3: memref<64x128xf32, #tpu.memory_space<vmem>>, %arg4: memref<1x128xf32, #tpu.memory_space<vmem>>, %arg5: memref<2x128xf32, #tpu.memory_space<vmem>>, %arg6: memref<2x64xf32, #tpu.memory_space<vmem>>) attributes {dimension_semantics = [#tpu.dimension_semantics<parallel>, #tpu.dimension_semantics<arbitrary>], iteration_bounds = array<i64: 1, 1>, scalar_prefetch = 0 : i64, scratch_operands = 1 : i64, tpu.core_type = #tpu.core_type<tc>, window_params = [{transform_indices = @transform_0, window_bounds = array<i64: 2, 64, 256>}, {pipeline_mode = #tpu.pipeline_mode<synchronous>, transform_indices = @transform_1, window_bounds = array<i64: 64, 128>}, {pipeline_mode = #tpu.pipeline_mode<synchronous>, transform_indices = @transform_2, window_bounds = array<i64: 1, 128>}, {transform_indices = @transform_3, window_bounds = array<i64: 2, 128>}]} {
    %c0_i32 = arith.constant 0 : i32
    %0 = arith.cmpi eq, %arg1, %c0_i32 : i32
    %1 = arith.extui %0 : i1 to i32
    %c0_i32_0 = arith.constant 0 : i32
    %2 = arith.cmpi ne, %1, %c0_i32_0 : i32
    scf.if %2 {
      %cst_9 = arith.constant 0.000000e+00 : f32
      %11 = vector.broadcast %cst_9 : f32 to vector<2x64xf32>
      %c0_10 = arith.constant 0 : index
      %c0_11 = arith.constant 0 : index
      %12 = vector.load %arg6[%c0_10, %c0_11] : memref<2x64xf32, #tpu.memory_space<vmem>>, vector<2x64xf32>
      tpu.vector_store %arg6[%c0_10, %c0_11], %11 {strides = array<i32>} : memref<2x64xf32, #tpu.memory_space<vmem>>, vector<2x64xf32>,
    } else {
    }
    %c0 = arith.constant 0 : index
    %c0_1 = arith.constant 0 : index
    %c0_2 = arith.constant 0 : index
    %3 = vector.load %arg2[%c0, %c0_1, %c0_2] : memref<2x64x256xf32, #tpu.memory_space<vmem>>, vector<2x64x256xf32>
    %c0_3 = arith.constant 0 : index
    %c0_4 = arith.constant 0 : index
    %4 = vector.load %arg6[%c0_3, %c0_4] : memref<2x64xf32, #tpu.memory_space<vmem>>, vector<2x64xf32>
    %cst = arith.constant dense<0.000000e+00> : vector<2x64xf32>
    %5 = vector.multi_reduction <add>, %3, %cst [2] : vector<2x64x256xf32> to vector<2x64xf32>
    %6 = arith.addf %4, %5 : vector<2x64xf32>
    %c0_5 = arith.constant 0 : index
    %c0_6 = arith.constant 0 : index
    %7 = vector.load %arg6[%c0_5, %c0_6] : memref<2x64xf32, #tpu.memory_space<vmem>>, vector<2x64xf32>
    tpu.vector_store %arg6[%c0_5, %c0_6], %6 {strides = array<i32>} : memref<2x64xf32, #tpu.memory_space<vmem>>, vector<2x64xf32>,
    %c0_i32_7 = arith.constant 0 : i32
    %8 = arith.cmpi eq, %arg1, %c0_i32_7 : i32
    %9 = arith.extui %8 : i1 to i32
    %c0_i32_8 = arith.constant 0 : i32
    %10 = arith.cmpi ne, %9, %c0_i32_8 : i32
    scf.if %10 {
      %c0_9 = arith.constant 0 : index
      %c0_10 = arith.constant 0 : index
      %11 = vector.load %arg6[%c0_9, %c0_10] : memref<2x64xf32, #tpu.memory_space<vmem>>, vector<2x64xf32>
      %c0_11 = arith.constant 0 : index
      %c0_12 = arith.constant 0 : index
      %12 = vector.load %arg3[%c0_11, %c0_12] : memref<64x128xf32, #tpu.memory_space<vmem>>, vector<64x128xf32>
      %cst_13 = arith.constant dense<0.000000e+00> : vector<2x128xf32>
      %13 = tpu.matmul %11, %12, %cst_13 {dimension_numbers = #tpu.dot_dimension_numbers<[1], [0], [0], [1], [0, 0, 1, 1], [], []>} : vector<2x64xf32>, vector<64x128xf32>, vector<2x128xf32> -> vector<2x128xf32>
      %c0_14 = arith.constant 0 : index
      %c0_15 = arith.constant 0 : index
      %14 = vector.load %arg4[%c0_14, %c0_15] : memref<1x128xf32, #tpu.memory_space<vmem>>, vector<1x128xf32>
      %15 = vector.broadcast %14 : vector<1x128xf32> to vector<2x128xf32>
      %16 = arith.addf %13, %15 : vector<2x128xf32>
      %c0_16 = arith.constant 0 : index
      %c0_17 = arith.constant 0 : index
      %17 = vector.load %arg5[%c0_16, %c0_17] : memref<2x128xf32, #tpu.memory_space<vmem>>, vector<2x128xf32>
      tpu.vector_store %arg5[%c0_16, %c0_17], %16 {strides = array<i32>} : memref<2x128xf32, #tpu.memory_space<vmem>>, vector<2x128xf32>,
    } else {
    }
    return
  }
  func.func @transform_0(%arg0: i32, %arg1: i32) -> (i32, i32, i32) {
    %c0_i32 = arith.constant 0 : i32
    %c0_i32_0 = arith.constant 0 : i32
    return %arg0, %c0_i32, %arg1 : i32, i32, i32
  }
  func.func @transform_1(%arg0: i32, %arg1: i32) -> (i32, i32) {
    %c0_i32 = arith.constant 0 : i32
    %c0_i32_0 = arith.constant 0 : i32
    %c0_i32_1 = arith.constant 0 : i32
    return %c0_i32, %c0_i32_0 : i32, i32
  }
  func.func @transform_2(%arg0: i32, %arg1: i32) -> (i32, i32) {
    %c0_i32 = arith.constant 0 : i32
    %c0_i32_0 = arith.constant 0 : i32
    %c0_i32_1 = arith.constant 0 : i32
    return %c0_i32, %c0_i32_0 : i32, i32
  }
  func.func @transform_3(%arg0: i32, %arg1: i32) -> (i32, i32) {
    %c0_i32 = arith.constant 0 : i32
    %c0_i32_0 = arith.constant 0 : i32
    return %arg0, %c0_i32 : i32, i32
  }
}

</mosaic_0001>

<llo_original>
// kernel: tpu_custom_call.1
$region0: #{tpu_custom_call.1}
  #allocation0 [shape = 'u32[]', space=smem, size = 0x4, offset = 0x4, fixed_abs, tag = 'smem constant byte address 0x4 - core index']
  #allocation1 [shape = 'u32[144,128]{1,0:T(1,128)}', space=vmem, size = 0x12000, scoped, tag = 'internal scratch']
  #allocation2 [shape = 'f32[2,64]{1,0:T(2,128)}', space=vmem, size = 0x400, scoped, tag = 'scratch operand']
  %s0 = inlined_call_operand.hbm [shape: f32[2,64,256], index: 0, kind: input, shape index: {}]
  %s1 = inlined_call_operand.hbm [shape: f32[64,128], index: 1, kind: input, shape index: {}]
  %s2 = inlined_call_operand.vmem [shape: f32[1,128], index: 2, kind: input, shape index: {}]
  %s3 = inlined_call_operand.hbm [shape: f32[2,128], index: 3, kind: output, shape index: {}]
  %s4 = sld [smem:[#allocation0]]
  $region38: #{tpu_custom_call.1} parent=0
    _
  %s6 = ssub.s32 1, %s4
  %s7 = scalar_select 0, %s6, %s4
  $region1: #{tpu_custom_call.1} parent=0
    #allocation3 [shape = 'u8[131072]{0}', space=vmem, size = 0x20000, scoped, tag = 'input window, operand 0, single buffered']
    #allocation4 [shape = 's32[1]{0}', space=sflag, size = 0x4, scoped, tag = 'scoped memory for tpu_custom_call.1']
    #allocation5 [shape = 's32[1]{0}', space=sflag, size = 0x4, scoped, tag = 'scoped memory for tpu_custom_call.1']
    #allocation6 [shape = 'u8[32768]{0}', space=vmem, size = 0x8000, scoped, tag = 'input window, operand 1, single buffered']
    #allocation7 [shape = 's32[1]{0}', space=sflag, size = 0x4, scoped, tag = 'scoped memory for tpu_custom_call.1']
    #allocation8 [shape = 'u8[1024]{0}', space=vmem, size = 0x400, scoped, tag = 'output window, operand 0, single buffered']
    %8 = vsyncpa [#allocation4], 0
    %9 = vsyncpa [#allocation7], 0
    %10 = vsyncpa [#allocation5], 0
    // Predicated region
    $region2: #{tpu_custom_call.1} parent=1 // pred_check
      _
    $region3: #{tpu_custom_call.1} parent=1 // pred_check_branch
      %12 = sbr.rel (0) target = $region5
    $region4: #{tpu_custom_call.1} parent=1 // pred_region
      %s14 = ssub.s32 4096, 4096
      %15 = vsyncadd [#allocation4], %s14
      %s16 = sshll.u32 [#allocation3], 4
      %s17 = int_to_ptr.vmem [resolvable:$true] %s16
      %22 = dma.hbm_to_vmem [thread:$0]  %s0, 4096, %s17, [#allocation4], 256, 256, 16
    $region5: #{tpu_custom_call.1} parent=1 // pred_fallthru
      _
    // Predicated region
    $region6: #{tpu_custom_call.1} parent=1 // pred_check
      _
    $region7: #{tpu_custom_call.1} parent=1 // pred_check_branch
      %24 = sbr.rel (0) target = $region9
    $region8: #{tpu_custom_call.1} parent=1 // pred_region
      %s26 = ssub.s32 1024, 1024
      %27 = vsyncadd [#allocation7], %s26
      %s28 = sshll.u32 [#allocation6], 4
      %s29 = int_to_ptr.vmem [resolvable:$true] %s28
      %34 = dma.hbm_to_vmem [thread:$0]  %s1, 1024, %s29, [#allocation7], 128, 128, 8
    $region9: #{tpu_custom_call.1} parent=1 // pred_fallthru
      _
    // Predicated region
    $region10: #{tpu_custom_call.1} parent=1 // pred_check
      _
    $region11: #{tpu_custom_call.1} parent=1 // pred_check_branch
      %36 = sbr.rel (0) target = $region13
    $region12: #{tpu_custom_call.1} parent=1 // pred_region
      _
    $region13: #{tpu_custom_call.1} parent=1 // pred_fallthru
      _
    // Predicated region
    $region14: #{tpu_custom_call.1} parent=1 // pred_check
      _
    $region15: #{tpu_custom_call.1} parent=1 // pred_check_branch
      %38 = sbr.rel (0) target = $region17
    $region16: #{tpu_custom_call.1} parent=1 // pred_region
      %39 = dma.done [#allocation4], 4096
    $region17: #{tpu_custom_call.1} parent=1 // pred_fallthru
      _
    // Predicated region
    $region18: #{tpu_custom_call.1} parent=1 // pred_check
      _
    $region19: #{tpu_custom_call.1} parent=1 // pred_check_branch
      %41 = sbr.rel (0) target = $region21
    $region20: #{tpu_custom_call.1} parent=1 // pred_region
      %42 = dma.done [#allocation7], 1024
    $region21: #{tpu_custom_call.1} parent=1 // pred_fallthru
      _
    %p43 = scmp.eq.s32.totalorder 0, 0
    // Predicated region
    $region22: #{tpu_custom_call.1} parent=1 // pred_check
      %p44 = pneg %p43
    $region23: #{tpu_custom_call.1} parent=1 // pred_check_branch
      %46 = sbr.rel (%p44) target = $region25
    $region24: #{tpu_custom_call.1} parent=1 // pred_region
      %vm47 = vcmask 517120
      %48 = vst.msk [vmem:[#allocation2] sm:$0x3] %vm47, 0.0
    $region25: #{tpu_custom_call.1} parent=1 // pred_fallthru
      _
    %v49 = vld [vmem:[#allocation3] sm:$0xff]
    %v50 = vld [vmem:[#allocation3 + $0x8] sm:$0xff]
    %v51 = vld [vmem:[#allocation3 + $0x10] sm:$0xff]
    %v52 = vld [vmem:[#allocation3 + $0x18] sm:$0xff]
    %v53 = vld [vmem:[#allocation3 + $0x20] sm:$0xff]
    %v54 = vld [vmem:[#allocation3 + $0x28] sm:$0xff]
    %v55 = vld [vmem:[#allocation3 + $0x30] sm:$0xff]
    %v56 = vld [vmem:[#allocation3 + $0x38] sm:$0xff]
    %v57 = vld [vmem:[#allocation3 + $0x40] sm:$0xff]
    %v58 = vld [vmem:[#allocation3 + $0x48] sm:$0xff]
    %v59 = vld [vmem:[#allocation3 + $0x50] sm:$0xff]
    %v60 = vld [vmem:[#allocation3 + $0x58] sm:$0xff]
    %v61 = vld [vmem:[#allocation3 + $0x60] sm:$0xff]
    %v62 = vld [vmem:[#allocation3 + $0x68] sm:$0xff]
    %v63 = vld [vmem:[#allocation3 + $0x70] sm:$0xff]
    %v64 = vld [vmem:[#allocation3 + $0x78] sm:$0xff]
    %v65 = vld [vmem:[#allocation3 + $0x80] sm:$0xff]
    %v66 = vld [vmem:[#allocation3 + $0x88] sm:$0xff]
    %v67 = vld [vmem:[#allocation3 + $0x90] sm:$0xff]
    %v68 = vld [vmem:[#allocation3 + $0x98] sm:$0xff]
    %v69 = vld [vmem:[#allocation3 + $0xa0] sm:$0xff]
    %v70 = vld [vmem:[#allocation3 + $0xa8] sm:$0xff]
    %v71 = vld [vmem:[#allocation3 + $0xb0] sm:$0xff]
    %v72 = vld [vmem:[#allocation3 + $0xb8] sm:$0xff]
    %v73 = vld [vmem:[#allocation3 + $0xc0] sm:$0xff]
    %v74 = vld [vmem:[#allocation3 + $0xc8] sm:$0xff]
    %v75 = vld [vmem:[#allocation3 + $0xd0] sm:$0xff]
    %v76 = vld [vmem:[#allocation3 + $0xd8] sm:$0xff]
    %v77 = vld [vmem:[#allocation3 + $0xe0] sm:$0xff]
    %v78 = vld [vmem:[#allocation3 + $0xe8] sm:$0xff]
    %v79 = vld [vmem:[#allocation3 + $0xf0] sm:$0xff]
    %v80 = vld [vmem:[#allocation3 + $0xf8] sm:$0xff]
    %v81 = vld [vmem:[#allocation2] sm:$0x3]
    %v82 = vadd.f32 %v49, %v50
    %83 = vadd.xlane.f32.xlu0 %v82
    %v84 = vpop.xlane.xlu0 %83
    %v85 = vadd.f32 %v51, %v52
    %86 = vadd.xlane.f32.xlu0 %v85
    %v87 = vpop.xlane.xlu0 %86
    %v88 = vadd.f32 %v53, %v54
    %89 = vadd.xlane.f32.xlu0 %v88
    %v90 = vpop.xlane.xlu0 %89
    %v91 = vadd.f32 %v55, %v56
    %92 = vadd.xlane.f32.xlu0 %v91
    %v93 = vpop.xlane.xlu0 %92
    %v94 = vadd.f32 %v57, %v58
    %95 = vadd.xlane.f32.xlu0 %v94
    %v96 = vpop.xlane.xlu0 %95
    %v97 = vadd.f32 %v59, %v60
    %98 = vadd.xlane.f32.xlu0 %v97
    %v99 = vpop.xlane.xlu0 %98
    %v100 = vadd.f32 %v61, %v62
    %101 = vadd.xlane.f32.xlu0 %v100
    %v102 = vpop.xlane.xlu0 %101
    %v103 = vadd.f32 %v63, %v64
    %104 = vadd.xlane.f32.xlu0 %v103
    %v105 = vpop.xlane.xlu0 %104
    %v106 = vadd.f32 %v65, %v66
    %107 = vadd.xlane.f32.xlu0 %v106
    %v108 = vpop.xlane.xlu0 %107
    %v109 = vadd.f32 %v67, %v68
    %110 = vadd.xlane.f32.xlu0 %v109
    %v111 = vpop.xlane.xlu0 %110
    %v112 = vadd.f32 %v69, %v70
    %113 = vadd.xlane.f32.xlu0 %v112
    %v114 = vpop.xlane.xlu0 %113
    %v115 = vadd.f32 %v71, %v72
    %116 = vadd.xlane.f32.xlu0 %v115
    %v117 = vpop.xlane.xlu0 %116
    %v118 = vadd.f32 %v73, %v74
    %119 = vadd.xlane.f32.xlu0 %v118
    %v120 = vpop.xlane.xlu0 %119
    %v121 = vadd.f32 %v75, %v76
    %122 = vadd.xlane.f32.xlu0 %v121
    %v123 = vpop.xlane.xlu0 %122
    %v124 = vadd.f32 %v77, %v78
    %125 = vadd.xlane.f32.xlu0 %v124
    %v126 = vpop.xlane.xlu0 %125
    %v127 = vadd.f32 %v79, %v80
    %128 = vadd.xlane.f32.xlu0 %v127
    %v129 = vpop.xlane.xlu0 %128
    %v146 = vlaneseq
    %v147 = vand.u32 %v146, 127
    %v148 = vlaneseq
    %v149 = vshrl.u32 %v148, 7
    %v150 = vsub.s32 %v147, %v149
    %v151 = vrot.slane %v84, %v150
    %v152 = vadd.s32 %v147, 4294967288
    %v153 = vlaneseq
    %v154 = vshrl.u32 %v153, 7
    %v155 = vsub.s32 %v152, %v154
    %v156 = vrot.slane %v87, %v155
    %vm157 = vcmask 130112
    %v158 = vsel %vm157, %v156, %v151
    %v159 = vadd.s32 %v147, 4294967280
    %v160 = vlaneseq
    %v161 = vshrl.u32 %v160, 7
    %v162 = vsub.s32 %v159, %v161
    %v163 = vrot.slane %v90, %v162
    %vm164 = vcmask 195712
    %v165 = vsel %vm164, %v163, %v158
    %v166 = vadd.s32 %v147, 4294967272
    %v167 = vlaneseq
    %v168 = vshrl.u32 %v167, 7
    %v169 = vsub.s32 %v166, %v168
    %v170 = vrot.slane %v93, %v169
    %vm171 = vcmask 261312
    %v172 = vsel %vm171, %v170, %v165
    %v173 = vadd.s32 %v147, 4294967264
    %v174 = vlaneseq
    %v175 = vshrl.u32 %v174, 7
    %v176 = vsub.s32 %v173, %v175
    %v177 = vrot.slane %v96, %v176
    %vm178 = vcmask 326912
    %v179 = vsel %vm178, %v177, %v172
    %v180 = vadd.s32 %v147, 4294967256
    %v181 = vlaneseq
    %v182 = vshrl.u32 %v181, 7
    %v183 = vsub.s32 %v180, %v182
    %v184 = vrot.slane %v99, %v183
    %vm185 = vcmask 392512
    %v186 = vsel %vm185, %v184, %v179
    %v187 = vadd.s32 %v147, 4294967248
    %v188 = vlaneseq
    %v189 = vshrl.u32 %v188, 7
    %v190 = vsub.s32 %v187, %v189
    %v191 = vrot.slane %v102, %v190
    %vm192 = vcmask 458112
    %v193 = vsel %vm192, %v191, %v186
    %v194 = vadd.s32 %v147, 4294967240
    %v195 = vlaneseq
    %v196 = vshrl.u32 %v195, 7
    %v197 = vsub.s32 %v194, %v196
    %v198 = vrot.slane %v105, %v197
    %vm199 = vcmask 523712
    %v200 = vsel %vm199, %v198, %v193
    %v201 = vlaneseq
    %v202 = vshrl.u32 %v201, 7
    %v203 = vsub.s32 %v147, %v202
    %v204 = vrot.slane %v108, %v203
    %v205 = vlaneseq
    %v206 = vshrl.u32 %v205, 7
    %v207 = vsub.s32 %v152, %v206
    %v208 = vrot.slane %v111, %v207
    %v209 = vsel %vm157, %v208, %v204
    %v210 = vlaneseq
    %v211 = vshrl.u32 %v210, 7
    %v212 = vsub.s32 %v159, %v211
    %v213 = vrot.slane %v114, %v212
    %v214 = vsel %vm164, %v213, %v209
    %v215 = vlaneseq
    %v216 = vshrl.u32 %v215, 7
    %v217 = vsub.s32 %v166, %v216
    %v218 = vrot.slane %v117, %v217
    %v219 = vsel %vm171, %v218, %v214
    %v220 = vlaneseq
    %v221 = vshrl.u32 %v220, 7
    %v222 = vsub.s32 %v173, %v221
    %v223 = vrot.slane %v120, %v222
    %v224 = vsel %vm178, %v223, %v219
    %v225 = vlaneseq
    %v226 = vshrl.u32 %v225, 7
    %v227 = vsub.s32 %v180, %v226
    %v228 = vrot.slane %v123, %v227
    %v229 = vsel %vm185, %v228, %v224
    %v230 = vlaneseq
    %v231 = vshrl.u32 %v230, 7
    %v232 = vsub.s32 %v187, %v231
    %v233 = vrot.slane %v126, %v232
    %v234 = vsel %vm192, %v233, %v229
    %v235 = vlaneseq
    %v236 = vshrl.u32 %v235, 7
    %v237 = vsub.s32 %v194, %v236
    %v238 = vrot.slane %v129, %v237
    %v239 = vsel %vm199, %v238, %v234
    %vm240 = vcmask 1041409
    %v241 = vsel %vm240, %v239, %v200
    %v243 = vadd.f32 %v81, %v241
    %vm244 = vcmask 517120
    %245 = vst.msk [vmem:[#allocation2] sm:$0x3] %vm244, %v243
    // Predicated region
    $region26: #{tpu_custom_call.1} parent=1 // pred_check
      %p246 = pneg %p43
    $region27: #{tpu_custom_call.1} parent=1 // pred_check_branch
      %248 = sbr.rel (%p246) target = $region29
    $region28: #{tpu_custom_call.1} parent=1 // pred_region
      %v249 = vld [vmem:[#allocation2] sm:$0x3]
      %v250 = vld [vmem:[#allocation6] sm:$0xff]
      %v251 = vld [vmem:[#allocation6 + $0x8] sm:$0xff]
      %v252 = vld [vmem:[#allocation6 + $0x10] sm:$0xff]
      %v253 = vld [vmem:[#allocation6 + $0x18] sm:$0xff]
      %v254 = vld [vmem:[#allocation6 + $0x20] sm:$0xff]
      %v255 = vld [vmem:[#allocation6 + $0x28] sm:$0xff]
      %v256 = vld [vmem:[#allocation6 + $0x30] sm:$0xff]
      %v257 = vld [vmem:[#allocation6 + $0x38] sm:$0xff]
      %v258 = vld [vmem:[%s2] sm:$0x1]
      %v260 = vlaneseq
      %v261 = vshrl.u32 %v260, 7
      %v262 = vsub.s32 0, %v261
      %v263 = vrot.slane %v258, %v262
      %vm265 = vcmask 523264
      %v267 = vsel %vm265, %v249, 0
      %269 = vmatprep.subr.mxu0 0.0
      %270 = vmatpush1.msra.mxu0 %v250
      %271 = vmatprep.subr.mxu0 0.0
      %272 = vmatpush1.msra.mxu0 %v251
      %273 = vmatprep.subr.mxu0 0.0
      %274 = vmatpush1.msra.mxu0 %v252
      %275 = vmatprep.subr.mxu0 0.0
      %276 = vmatpush1.msra.mxu0 %v253
      %277 = vmatprep.subr.mxu0 0.0
      %278 = vmatpush1.msra.mxu0 %v254
      %279 = vmatprep.subr.mxu0 0.0
      %280 = vmatpush1.msra.mxu0 %v255
      %281 = vmatprep.subr.mxu0 0.0
      %282 = vmatpush1.msra.mxu0 %v256
      %283 = vmatprep.subr.mxu0 0.0
      %284 = vmatpush1.msra.mxu0 %v257
      %285 = vmatprep.subr.mxu0 0.0
      %286 = vmatpush1.msra.mxu0 0.0
      %287 = vmatprep.subr.mxu0 0.0
      %288 = vmatpush1.msra.mxu0 0.0
      %289 = vmatprep.subr.mxu0 0.0
      %290 = vmatpush1.msra.mxu0 0.0
      %291 = vmatprep.subr.mxu0 0.0
      %292 = vmatpush1.msra.mxu0 0.0
      %293 = vmatprep.subr.mxu0 0.0
      %294 = vmatpush1.msra.mxu0 0.0
      %295 = vmatprep.subr.mxu0 0.0
      %296 = vmatpush1.msra.mxu0 0.0
      %297 = vmatprep.subr.mxu0 0.0
      %298 = vmatpush1.msra.mxu0 0.0
      %299 = vmatprep.subr.mxu0 0.0
      %300 = vmatpush1.msra.mxu0 0.0
      %301 = vmatprep.subr.mxu0 0.0
      %302 = vmatpush1.msra.mxu0 0.0
      %303 = vmatprep.subr.mxu0 0.0
      %304 = vmatpush1.msra.mxu0 0.0
      %305 = vmatprep.subr.mxu0 0.0
      %306 = vmatpush1.msra.mxu0 0.0
      %307 = vmatprep.subr.mxu0 0.0
      %308 = vmatpush1.msra.mxu0 0.0
      %309 = vmatprep.subr.mxu0 0.0
      %310 = vmatpush1.msra.mxu0 0.0
      %311 = vmatprep.subr.mxu0 0.0
      %312 = vmatpush1.msra.mxu0 0.0
      %313 = vmatprep.subr.mxu0 0.0
      %314 = vmatpush1.msra.mxu0 0.0
      %315 = vmatprep.subr.mxu0 0.0
      %316 = vmatpush1.msra.mxu0 0.0
      %317 = vmatprep.subr.mxu0 0.0
      %318 = vmatpush1.msra.mxu0 0.0
      %319 = vmatprep.subr.mxu0 0.0
      %320 = vmatpush1.msra.mxu0 0.0
      %321 = vmatprep.subr.mxu0 0.0
      %322 = vmatpush1.msra.mxu0 0.0
      %323 = vmatprep.subr.mxu0 0.0
      %324 = vmatpush1.msra.mxu0 0.0
      %325 = vmatprep.subr.mxu0 0.0
      %326 = vmatpush1.msra.mxu0 0.0
      %327 = vmatprep.subr.mxu0 0.0
      %328 = vmatpush1.msra.mxu0 0.0
      %329 = vmatprep.subr.mxu0 0.0
      %330 = vmatpush1.msra.mxu0 0.0
      %331 = vmatprep.subr.mxu0 0.0
      %332 = vmatpush1.msra.mxu0 0.0
      %333 = vmatprep.mubr.f32.mxu0 0.0
      %334 = vmatmul.mubr.f32.gmra.mrb[0].mxu0 %v267
      %v335 = vpop.f32.mrb[0].mxu0
      %v336 = vadd.f32 %v263, %v335
      %v337 = vpop.f32.mrb[0].mxu0
      %338 = vdwg.mxu0
      %339 = vst [vmem:[#allocation8] sm:$0x3] %v336
    $region29: #{tpu_custom_call.1} parent=1 // pred_fallthru
      _
    // Predicated region
    $region30: #{tpu_custom_call.1} parent=1 // pred_check
      _
    $region31: #{tpu_custom_call.1} parent=1 // pred_check_branch
      %341 = sbr.rel (0) target = $region33
    $region32: #{tpu_custom_call.1} parent=1 // pred_region
      %s343 = ssub.s32 32, 32
      %344 = vsyncadd [#allocation5], %s343
      %s346 = sshll.u32 [#allocation8], 4
      %s347 = int_to_ptr.vmem [resolvable:$true] %s346
      %349 = dma.vmem_to_hbm [thread:$0]  %s347, 32, %s3, [#allocation5]
    $region33: #{tpu_custom_call.1} parent=1 // pred_fallthru
      _
    // Predicated region
    $region34: #{tpu_custom_call.1} parent=1 // pred_check
      _
    $region35: #{tpu_custom_call.1} parent=1 // pred_check_branch
      %351 = sbr.rel (0) target = $region37
    $region36: #{tpu_custom_call.1} parent=1 // pred_region
      %352 = dma.done [#allocation5], 32
    $region37: #{tpu_custom_call.1} parent=1 // pred_fallthru
      _
    %353 = vsyncpa [#allocation4], 1
    %354 = vsyncpa [#allocation7], 1
    %355 = vsyncpa [#allocation5], 1

</llo_original>
